<compile_context>
chip_gen: v7x
topology: tpu7x:2x2x1
jax: 0.10.0
libtpu: 0.0.40
codegen_flags: <defaults>
</compile_context>

<pallas_src>
import functools

import jax
import jax.numpy as jnp
from jax.experimental import pallas as pl
from jax.experimental.pallas import tpu as pltpu


def _round_up(x, m):
    return (x + m - 1) // m * m


def _cdiv(a, b):
    return -(-a // b)


# ---------------------------------------------------------------------------
# Kernel
# ---------------------------------------------------------------------------
def ffn_kernel(x_ref, w1_ref, b1_ref, w2_ref, b2_ref, o_ref, acc_ref):
    # grid = (i: token tiles [parallel], j: d_ff tiles [arbitrary / reduction])
    # x_ref : (tm, d_model_p)        resident across j
    # w1_ref: (d_model_p, tf)        column block j of W1
    # b1_ref: (1, tf)                slice j of b1 (f32)
    # w2_ref: (tf, d_model_p)        row block j of W2
    # b2_ref: (1, d_model_p)         (f32)
    # o_ref : (tm, d_model_p)        resident across j (written at j == last)
    # acc_ref: (tm, d_model_p)       f32 accumulator scratch
    j = pl.program_id(1)

    @pl.when(j == 0)
    def _():
        acc_ref[...] = jnp.zeros_like(acc_ref)

    # First projection on this d_ff slice: (tm, dm) @ (dm, tf) -> f32 (tm, tf)
    h = jnp.dot(x_ref[...], w1_ref[...], preferred_element_type=jnp.float32)
    # Bias + ReLU run on the VPU while the MXU is busy; h never hits VMEM scratch.
    h = jnp.maximum(h + b1_ref[...], 0.0)
    # TODO(synk): nn.Dropout is identity in eval mode; training-mode masking
    # (pltpu.prng_seed + pltpu.stateful_bernoulli + 1/(1-p) scaling) not implemented.

    # Second projection, accumulated over d_ff tiles into the f32 accumulator.
    acc_ref[...] += jnp.dot(h.astype(w2_ref.dtype), w2_ref[...],
                            preferred_element_type=jnp.float32)

    @pl.when(j == pl.num_programs(1) - 1)
    def _():
        o_ref[...] = (acc_ref[...] + b2_ref[...]).astype(o_ref.dtype)


# ---------------------------------------------------------------------------
# VMEM budget (generation-aware)
# ---------------------------------------------------------------------------
@functools.lru_cache(maxsize=1)
def _vmem_budget():
    cap = 64 * 1024 * 1024  # conservative fallback: v7x per-TensorCore VMEM
    try:
        info = pltpu.get_tpu_info()
        cap_q = getattr(info, "vmem_capacity_bytes", None)
        if cap_q:
            cap = int(cap_q)
    except Exception:
        pass
    # vmem_limit: above the default scoped limit, below physical capacity
    # (leave headroom for Mosaic internal scratch / semaphores).
    vmem_limit = min(int(cap * 0.84), cap - 8 * 1024 * 1024)
    # Tile-sizing budget (double-buffered inputs/outputs + accumulator).
    budget = min(int(cap * 0.68), 100 * 1024 * 1024)
    return budget, vmem_limit


# ---------------------------------------------------------------------------
# Padding / weight preparation (hoisted out of the per-call hot path)
# ---------------------------------------------------------------------------
def _pad_cast_2d(a, rows, cols, dtype):
    a = a.astype(dtype)          # no-op if dtype already matches
    if a.shape == (rows, cols):
        return a                 # skip the zero/set copy when already aligned
    out = jnp.zeros((rows, cols), dtype)
    return out.at[:a.shape[0], :a.shape[1]].set(a)


def prepare_ffn_params(w1, b1, w2, b2, *, compute_dtype=None, x_dtype=None):
    """Pad/cast FFN parameters once (cache the result across calls).

    w1: (d_model, d_ff) = linear_1.weight.T ; b1: (d_ff,) or (1, d_ff)
    w2: (d_ff, d_model) = linear_2.weight.T ; b2: (d_model,) or (1, d_model)
    """
    d_model, d_ff = w1.shape
    if compute_dtype is None:
        base = jnp.dtype(x_dtype) if x_dtype is not None else jnp.dtype(w1.dtype)
        # Default to bf16 MXU compute (f32 accumulation) for f32 inputs:
        # native MXU path + half the weight HBM traffic.
        compute_dtype = jnp.bfloat16 if base == jnp.dtype(jnp.float32) else base
    # Round feature dims to 256 when cheap (2x256x256 MXU on v6e/v7x), else 128.
    dm_g = 256 if d_model >= 512 else 128
    ff_g = 256 if d_ff >= 512 else 128
    d_model_p = _round_up(d_model, dm_g)
    d_ff_p = _round_up(d_ff, ff_g)

    w1_p = _pad_cast_2d(w1, d_model_p, d_ff_p, compute_dtype)
    w2_p = _pad_cast_2d(w2, d_ff_p, d_model_p, compute_dtype)
    b1_p = _pad_cast_2d(jnp.reshape(b1, (1, -1)), 1, d_ff_p, jnp.float32)
    b2_p = _pad_cast_2d(jnp.reshape(b2, (1, -1)), 1, d_model_p, jnp.float32)
    return (w1_p, b1_p, w2_p, b2_p)


# ---------------------------------------------------------------------------
# Core call on pre-padded weights
# ---------------------------------------------------------------------------
@functools.partial(jax.jit, static_argnames=("d_model", "tm"))
def _ffn_padded(x2, w1_p, b1_p, w2_p, b2_p, *, d_model, tm):
    """x2: (M, d_model) tokens; padded weights from prepare_ffn_params."""
    M = x2.shape[0]
    d_model_p, d_ff_p = w1_p.shape
    cdtype = w1_p.dtype
    out_dtype = x2.dtype
    cbytes = jnp.dtype(cdtype).itemsize
    obytes = jnp.dtype(out_dtype).itemsize
    budget, vmem_limit = _vmem_budget()

    def vmem_bytes(tm_, tf_):
        return (2 * tm_ * d_model_p * cbytes        # x tiles (double-buffered)
                + 2 * d_model_p * tf_ * cbytes      # W1 column tiles
                + 2 * tf_ * d_model_p * cbytes      # W2 row tiles
                + 2 * tf_ * 4 + 2 * d_model_p * 4   # biases (f32)
                + 2 * tm_ * d_model_p * obytes      # output tiles
                + tm_ * d_model_p * 4)              # f32 accumulator scratch

    ff_g = 256 if d_ff_p % 256 == 0 else 128

    def pick_tf(tm_):
        # Largest tf that evenly divides d_ff_p, is a multiple of ff_g, and
        # fits the budget.  nj == 1 (tf == d_ff_p) keeps W1/W2 VMEM-resident
        # across all token tiles.
        for nj in range(1, d_ff_p // ff_g + 1):
            if d_ff_p % nj:
                continue
            tf_ = d_ff_p // nj
            if tf_ % ff_g:
                continue
            if vmem_bytes(tm_, tf_) <= budget:
                return tf_
        return ff_g

    # ---- token tile selection: keep tm large (weight-reuse roofline), shrink
    #      tf first; only shrink tm if even the smallest tf does not fit. ----
    M_rounded = _round_up(M, 16)
    tm = min(_round_up(max(tm, 16), 16), M_rounded)
    # Megacore (v7x): prefer an even number (>= 2) of token tiles when there is
    # enough work for two TensorCores without dropping tm below ~384.
    if M_rounded >= 2 * 384:
        nt = max(2, _cdiv(M_rounded, tm))
        if nt % 2:
            nt += 1
        tm = max(384, _round_up(_cdiv(M_rounded, nt), 16))
    tf = pick_tf(tm)
    while vmem_bytes(tm, tf) > budget and tm > 16:
        tm = max(16, _round_up(tm // 2, 16))
        tf = pick_tf(tm)
    # TODO(synk): on v5e (128 MiB VMEM, lowest HBM BW) pipeline_mode=pl.Buffered(3)
    # on the W1/W2 BlockSpecs can hide residual DMA jitter; not enabled by default.

    M_p = _round_up(M, tm)
    grid = (M_p // tm, d_ff_p // tf)

    # ---- pad activations (padded rows/lanes contribute exactly zero) ----
    x_p = _pad_cast_2d(x2, M_p, d_model_p, cdtype)

    # ---- advisory cost estimate for the XLA scheduler ----
    flops = 4 * M_p * d_model_p * d_ff_p          # two matmuls
    w_bytes = (d_model_p * d_ff_p + d_ff_p * d_model_p) * cbytes
    bytes_accessed = (M_p * d_model_p * cbytes                      # x
                      + w_bytes * (grid[0] if grid[1] > 1 else 1)   # W1 + W2
                      + (d_ff_p + d_model_p) * 4                    # biases
                      + M_p * d_model_p * obytes)                   # out

    out_p = pl.pallas_call(
        ffn_kernel,
        out_shape=jax.ShapeDtypeStruct((M_p, d_model_p), out_dtype),
        grid_spec=pltpu.PrefetchScalarGridSpec(
            num_scalar_prefetch=0,
            grid=grid,
            in_specs=[
                pl.BlockSpec((tm, d_model_p), lambda i, j: (i, 0)),   # x tile
                pl.BlockSpec((d_model_p, tf), lambda i, j: (0, j)),   # W1 col block
                pl.BlockSpec((1, tf), lambda i, j: (0, j)),           # b1 slice
                pl.BlockSpec((tf, d_model_p), lambda i, j: (j, 0)),   # W2 row block
                pl.BlockSpec((1, d_model_p), lambda i, j: (0, 0)),    # b2
            ],
            out_specs=pl.BlockSpec((tm, d_model_p), lambda i, j: (i, 0)),
            scratch_shapes=[pltpu.VMEM((tm, d_model_p), jnp.float32)],
        ),
        compiler_params=pltpu.CompilerParams(
            dimension_semantics=("parallel", "arbitrary"),
            vmem_limit_bytes=int(vmem_limit),
        ),
        cost_estimate=pl.CostEstimate(flops=int(flops),
                                      transcendentals=0,
                                      bytes_accessed=int(bytes_accessed)),
    )(x_p, w1_p, b1_p, w2_p, b2_p)

    return out_p[:M, :d_model]


# ---------------------------------------------------------------------------
# Public wrappers
# ---------------------------------------------------------------------------
def feed_forward(x, w1, b1, w2, b2, *, tm=1024, compute_dtype=None):
    """x: (..., d_model) -> (..., d_model).

    Eval-mode equivalent of: linear_2(dropout(relu(linear_1(x)))) with
    W1 = linear_1.weight.T (d_model, d_ff), W2 = linear_2.weight.T (d_ff, d_model).
    Pads/casts weights per call; for repeated calls use FeedForwardTPU.
    """
    d_model = x.shape[-1]
    params = prepare_ffn_params(w1, b1, w2, b2,
                                compute_dtype=compute_dtype, x_dtype=x.dtype)
    x2 = x.reshape(-1, d_model)
    out = _ffn_padded(x2, *params, d_model=d_model, tm=tm)
    return out.reshape(x.shape)


class FeedForwardTPU:
    """Caches padded / bf16-cast weights so the per-call path is kernel-only."""

    def __init__(self, w1, b1, w2, b2, *, compute_dtype=None, tm=1024):
        self.d_model = w1.shape[0]
        self.tm = tm
        self.params = prepare_ffn_params(w1, b1, w2, b2,
                                         compute_dtype=compute_dtype)

    def __call__(self, x):
        x2 = x.reshape(-1, self.d_model)
        out = _ffn_padded(x2, *self.params, d_model=self.d_model, tm=self.tm)
        return out.reshape(x.shape)


def init_params(key, d_model, d_ff, dtype=jnp.float32):
    # Deterministic init mimicking nn.Linear's uniform(-1/sqrt(fan_in), 1/sqrt(fan_in)).
    k1, k2, k3, k4 = jax.random.split(key, 4)
    bound1 = 1.0 / (d_model ** 0.5)
    bound2 = 1.0 / (d_ff ** 0.5)
    w1 = jax.random.uniform(k1, (d_model, d_ff), dtype, -bound1, bound1)
    b1 = jax.random.uniform(k2, (1, d_ff), dtype, -bound1, bound1)
    w2 = jax.random.uniform(k3, (d_ff, d_model), dtype, -bound2, bound2)
    b2 = jax.random.uniform(k4, (1, d_model), dtype, -bound2, bound2)
    return w1, b1, w2, b2


if __name__ == "__main__":
    batch, seq, d_model, d_ff = 2, 8, 32, 128

    key = jax.random.PRNGKey(0)
    kx, kp = jax.random.split(key)
    x = jax.random.normal(kx, (batch, seq, d_model), jnp.float32)
    w1, b1, w2, b2 = init_params(kp, d_model, d_ff)

    # Pure-JAX reference (dropout identity / eval mode).
    ref = jnp.maximum(x @ w1 + b1[0], 0.0) @ w2 + b2[0]

    # Exact f32 compute path (parity with reference).
    out = jax.block_until_ready(
        feed_forward(x, w1, b1, w2, b2, compute_dtype=jnp.float32))
    assert out.shape == (batch, seq, d_model)
    assert jnp.allclose(out, ref, atol=1e-5, rtol=1e-5)

    # Default fast path: bf16 MXU compute (f32 accumulation), cached padded weights.
    ffn = FeedForwardTPU(w1, b1, w2, b2)
    out_bf16 = jax.block_until_ready(ffn(x))
    assert out_bf16.shape == (batch, seq, d_model)
    assert jnp.allclose(out_bf16, ref, atol=3e-2, rtol=3e-2)

    print("KERNEL_OK")
</pallas_src>

<mosaic_0001>
module attributes {stable_mosaic.version = 11 : i64} {
  func.func @ffn_kernel(%arg0: i32, %arg1: i32, %arg2: memref<16x128xf32, #tpu.memory_space<vmem>>, %arg3: memref<128x128xf32, #tpu.memory_space<vmem>>, %arg4: memref<1x128xf32, #tpu.memory_space<vmem>>, %arg5: memref<128x128xf32, #tpu.memory_space<vmem>>, %arg6: memref<1x128xf32, #tpu.memory_space<vmem>>, %arg7: memref<16x128xf32, #tpu.memory_space<vmem>>, %arg8: memref<16x128xf32, #tpu.memory_space<vmem>>) attributes {dimension_semantics = [#tpu.dimension_semantics<parallel>, #tpu.dimension_semantics<arbitrary>], iteration_bounds = array<i64: 1, 1>, scalar_prefetch = 0 : i64, scratch_operands = 1 : i64, tpu.core_type = #tpu.core_type<tc>, window_params = [{transform_indices = @transform_0, window_bounds = array<i64: 16, 128>}, {transform_indices = @transform_1, window_bounds = array<i64: 128, 128>}, {transform_indices = @transform_2, window_bounds = array<i64: 1, 128>}, {transform_indices = @transform_3, window_bounds = array<i64: 128, 128>}, {pipeline_mode = #tpu.pipeline_mode<synchronous>, transform_indices = @transform_4, window_bounds = array<i64: 1, 128>}, {transform_indices = @transform_5, window_bounds = array<i64: 16, 128>}]} {
    %c0_i32 = arith.constant 0 : i32
    %0 = arith.cmpi eq, %arg1, %c0_i32 : i32
    %1 = arith.extui %0 : i1 to i32
    %c0_i32_0 = arith.constant 0 : i32
    %2 = arith.cmpi ne, %1, %c0_i32_0 : i32
    scf.if %2 {
      %cst_16 = arith.constant 0.000000e+00 : f32
      %19 = vector.broadcast %cst_16 : f32 to vector<16x128xf32>
      %c0_17 = arith.constant 0 : index
      %c0_18 = arith.constant 0 : index
      %20 = vector.load %arg8[%c0_17, %c0_18] : memref<16x128xf32, #tpu.memory_space<vmem>>, vector<16x128xf32>
      tpu.vector_store %arg8[%c0_17, %c0_18], %19 {strides = array<i32>} : memref<16x128xf32, #tpu.memory_space<vmem>>, vector<16x128xf32>,
    } else {
    }
    %c0 = arith.constant 0 : index
    %c0_1 = arith.constant 0 : index
    %3 = vector.load %arg2[%c0, %c0_1] : memref<16x128xf32, #tpu.memory_space<vmem>>, vector<16x128xf32>
    %c0_2 = arith.constant 0 : index
    %c0_3 = arith.constant 0 : index
    %4 = vector.load %arg3[%c0_2, %c0_3] : memref<128x128xf32, #tpu.memory_space<vmem>>, vector<128x128xf32>
    %cst = arith.constant dense<0.000000e+00> : vector<16x128xf32>
    %5 = tpu.matmul %3, %4, %cst {dimension_numbers = #tpu.dot_dimension_numbers<[1], [0], [0], [1], [0, 0, 1, 1], [], []>} : vector<16x128xf32>, vector<128x128xf32>, vector<16x128xf32> -> vector<16x128xf32>
    %c0_4 = arith.constant 0 : index
    %c0_5 = arith.constant 0 : index
    %6 = vector.load %arg4[%c0_4, %c0_5] : memref<1x128xf32, #tpu.memory_space<vmem>>, vector<1x128xf32>
    %7 = vector.broadcast %6 : vector<1x128xf32> to vector<16x128xf32>
    %8 = arith.addf %5, %7 : vector<16x128xf32>
    %cst_6 = arith.constant 0.000000e+00 : f32
    %9 = vector.broadcast %cst_6 : f32 to vector<16x128xf32>
    %10 = arith.maximumf %8, %9 : vector<16x128xf32>
    %c0_7 = arith.constant 0 : index
    %c0_8 = arith.constant 0 : index
    %11 = vector.load %arg8[%c0_7, %c0_8] : memref<16x128xf32, #tpu.memory_space<vmem>>, vector<16x128xf32>
    %c0_9 = arith.constant 0 : index
    %c0_10 = arith.constant 0 : index
    %12 = vector.load %arg5[%c0_9, %c0_10] : memref<128x128xf32, #tpu.memory_space<vmem>>, vector<128x128xf32>
    %cst_11 = arith.constant dense<0.000000e+00> : vector<16x128xf32>
    %13 = tpu.matmul %10, %12, %cst_11 {dimension_numbers = #tpu.dot_dimension_numbers<[1], [0], [0], [1], [0, 0, 1, 1], [], []>} : vector<16x128xf32>, vector<128x128xf32>, vector<16x128xf32> -> vector<16x128xf32>
    %14 = arith.addf %11, %13 : vector<16x128xf32>
    %c0_12 = arith.constant 0 : index
    %c0_13 = arith.constant 0 : index
    %15 = vector.load %arg8[%c0_12, %c0_13] : memref<16x128xf32, #tpu.memory_space<vmem>>, vector<16x128xf32>
    tpu.vector_store %arg8[%c0_12, %c0_13], %14 {strides = array<i32>} : memref<16x128xf32, #tpu.memory_space<vmem>>, vector<16x128xf32>,
    %c0_i32_14 = arith.constant 0 : i32
    %16 = arith.cmpi eq, %arg1, %c0_i32_14 : i32
    %17 = arith.extui %16 : i1 to i32
    %c0_i32_15 = arith.constant 0 : i32
    %18 = arith.cmpi ne, %17, %c0_i32_15 : i32
    scf.if %18 {
      %c0_16 = arith.constant 0 : index
      %c0_17 = arith.constant 0 : index
      %19 = vector.load %arg8[%c0_16, %c0_17] : memref<16x128xf32, #tpu.memory_space<vmem>>, vector<16x128xf32>
      %c0_18 = arith.constant 0 : index
      %c0_19 = arith.constant 0 : index
      %20 = vector.load %arg6[%c0_18, %c0_19] : memref<1x128xf32, #tpu.memory_space<vmem>>, vector<1x128xf32>
      %21 = vector.broadcast %20 : vector<1x128xf32> to vector<16x128xf32>
      %22 = arith.addf %19, %21 : vector<16x128xf32>
      %c0_20 = arith.constant 0 : index
      %c0_21 = arith.constant 0 : index
      %23 = vector.load %arg7[%c0_20, %c0_21] : memref<16x128xf32, #tpu.memory_space<vmem>>, vector<16x128xf32>
      tpu.vector_store %arg7[%c0_20, %c0_21], %22 {strides = array<i32>} : memref<16x128xf32, #tpu.memory_space<vmem>>, vector<16x128xf32>,
    } else {
    }
    return
  }
  func.func @transform_0(%arg0: i32, %arg1: i32) -> (i32, i32) {
    %c0_i32 = arith.constant 0 : i32
    %c0_i32_0 = arith.constant 0 : i32
    return %arg0, %c0_i32 : i32, i32
  }
  func.func @transform_1(%arg0: i32, %arg1: i32) -> (i32, i32) {
    %c0_i32 = arith.constant 0 : i32
    %c0_i32_0 = arith.constant 0 : i32
    return %c0_i32, %arg1 : i32, i32
  }
  func.func @transform_2(%arg0: i32, %arg1: i32) -> (i32, i32) {
    %c0_i32 = arith.constant 0 : i32
    %c0_i32_0 = arith.constant 0 : i32
    return %c0_i32, %arg1 : i32, i32
  }
  func.func @transform_3(%arg0: i32, %arg1: i32) -> (i32, i32) {
    %c0_i32 = arith.constant 0 : i32
    %c0_i32_0 = arith.constant 0 : i32
    return %arg1, %c0_i32 : i32, i32
  }
  func.func @transform_4(%arg0: i32, %arg1: i32) -> (i32, i32) {
    %c0_i32 = arith.constant 0 : i32
    %c0_i32_0 = arith.constant 0 : i32
    %c0_i32_1 = arith.constant 0 : i32
    return %c0_i32, %c0_i32_0 : i32, i32
  }
  func.func @transform_5(%arg0: i32, %arg1: i32) -> (i32, i32) {
    %c0_i32 = arith.constant 0 : i32
    %c0_i32_0 = arith.constant 0 : i32
    return %arg0, %c0_i32 : i32, i32
  }
}

</mosaic_0001>

<llo_original>
// kernel: _ffn_padded.1
$region0: #{_ffn_padded.1}
  #allocation0 [shape = 'u32[]', space=smem, size = 0x4, offset = 0x4, fixed_abs, tag = 'smem constant byte address 0x4 - core index']
  #allocation1 [shape = 'u32[144,128]{1,0:T(1,128)}', space=vmem, size = 0x12000, scoped, tag = 'internal scratch']
  #allocation2 [shape = 'f32[16,128]{1,0:T(8,128)}', space=vmem, size = 0x2000, scoped, tag = 'scratch operand']
  %s0 = inlined_call_operand.vmem [shape: f32[16,128], index: 0, kind: input, shape index: {}]
  %s1 = inlined_call_operand.hbm [shape: f32[128,128], index: 1, kind: input, shape index: {}]
  %s2 = inlined_call_operand.vmem [shape: f32[1,128], index: 2, kind: input, shape index: {}]
  %s3 = inlined_call_operand.hbm [shape: f32[128,128], index: 3, kind: input, shape index: {}]
  %s4 = inlined_call_operand.vmem [shape: f32[1,128], index: 4, kind: input, shape index: {}]
  %s5 = inlined_call_operand.hbm [shape: f32[16,128], index: 5, kind: output, shape index: {}]
  %s6 = sld [smem:[#allocation0]]
  $region46: #{_ffn_padded.1} parent=0
    _
  %s8 = ssub.s32 1, %s6
  %s9 = scalar_select 0, %s8, %s6
  $region1: #{_ffn_padded.1} parent=0
    #allocation3 [shape = 'u8[65536]{0}', space=vmem, size = 0x10000, scoped, tag = 'input window, operand 1, single buffered']
    #allocation4 [shape = 's32[1]{0}', space=sflag, size = 0x4, scoped, tag = 'scoped memory for _ffn_padded.1']
    #allocation5 [shape = 's32[1]{0}', space=sflag, size = 0x4, scoped, tag = 'scoped memory for _ffn_padded.1']
    #allocation6 [shape = 'u8[65536]{0}', space=vmem, size = 0x10000, scoped, tag = 'input window, operand 3, single buffered']
    #allocation7 [shape = 's32[1]{0}', space=sflag, size = 0x4, scoped, tag = 'scoped memory for _ffn_padded.1']
    #allocation8 [shape = 'u8[8192]{0}', space=vmem, size = 0x2000, scoped, tag = 'output window, operand 0, single buffered']
    %10 = vsyncpa [#allocation4], 0
    %11 = vsyncpa [#allocation7], 0
    %12 = vsyncpa [#allocation5], 0
    // Predicated region
    $region2: #{_ffn_padded.1} parent=1 // pred_check
      _
    $region3: #{_ffn_padded.1} parent=1 // pred_check_branch
      %14 = sbr.rel (0) target = $region5
    $region4: #{_ffn_padded.1} parent=1 // pred_region
      _
    $region5: #{_ffn_padded.1} parent=1 // pred_fallthru
      _
    // Predicated region
    $region6: #{_ffn_padded.1} parent=1 // pred_check
      _
    $region7: #{_ffn_padded.1} parent=1 // pred_check_branch
      %16 = sbr.rel (0) target = $region9
    $region8: #{_ffn_padded.1} parent=1 // pred_region
      %s18 = ssub.s32 2048, 2048
      %19 = vsyncadd [#allocation4], %s18
      %s20 = sshll.u32 [#allocation3], 4
      %s21 = int_to_ptr.vmem [resolvable:$true] %s20
      %26 = dma.hbm_to_vmem [thread:$0]  %s1, 2048, %s21, [#allocation4], 128, 128, 8
    $region9: #{_ffn_padded.1} parent=1 // pred_fallthru
      _
    // Predicated region
    $region10: #{_ffn_padded.1} parent=1 // pred_check
      _
    $region11: #{_ffn_padded.1} parent=1 // pred_check_branch
      %28 = sbr.rel (0) target = $region13
    $region12: #{_ffn_padded.1} parent=1 // pred_region
      _
    $region13: #{_ffn_padded.1} parent=1 // pred_fallthru
      _
    // Predicated region
    $region14: #{_ffn_padded.1} parent=1 // pred_check
      _
    $region15: #{_ffn_padded.1} parent=1 // pred_check_branch
      %30 = sbr.rel (0) target = $region17
    $region16: #{_ffn_padded.1} parent=1 // pred_region
      %s32 = ssub.s32 2048, 2048
      %33 = vsyncadd [#allocation7], %s32
      %s34 = sshll.u32 [#allocation6], 4
      %s35 = int_to_ptr.vmem [resolvable:$true] %s34
      %40 = dma.hbm_to_vmem [thread:$0]  %s3, 2048, %s35, [#allocation7], 128, 128, 8
    $region17: #{_ffn_padded.1} parent=1 // pred_fallthru
      _
    // Predicated region
    $region18: #{_ffn_padded.1} parent=1 // pred_check
      _
    $region19: #{_ffn_padded.1} parent=1 // pred_check_branch
      %42 = sbr.rel (0) target = $region21
    $region20: #{_ffn_padded.1} parent=1 // pred_region
      _
    $region21: #{_ffn_padded.1} parent=1 // pred_fallthru
      _
    // Predicated region
    $region22: #{_ffn_padded.1} parent=1 // pred_check
      _
    $region23: #{_ffn_padded.1} parent=1 // pred_check_branch
      %44 = sbr.rel (0) target = $region25
    $region24: #{_ffn_padded.1} parent=1 // pred_region
      %45 = dma.done [#allocation4], 2048
    $region25: #{_ffn_padded.1} parent=1 // pred_fallthru
      _
    // Predicated region
    $region26: #{_ffn_padded.1} parent=1 // pred_check
      _
    $region27: #{_ffn_padded.1} parent=1 // pred_check_branch
      %47 = sbr.rel (0) target = $region29
    $region28: #{_ffn_padded.1} parent=1 // pred_region
      %48 = dma.done [#allocation7], 2048
    $region29: #{_ffn_padded.1} parent=1 // pred_fallthru
      _
    %p49 = scmp.eq.s32.totalorder 0, 0
    // Predicated region
    $region30: #{_ffn_padded.1} parent=1 // pred_check
      %p50 = pneg %p49
    $region31: #{_ffn_padded.1} parent=1 // pred_check_branch
      %52 = sbr.rel (%p50) target = $region33
    $region32: #{_ffn_padded.1} parent=1 // pred_region
      %53 = vst [vmem:[#allocation2] sm:$0xff] 0.0
      %54 = vst [vmem:[#allocation2 + $0x8] sm:$0xff] 0.0
    $region33: #{_ffn_padded.1} parent=1 // pred_fallthru
      _
    %v55 = vld [vmem:[%s0] sm:$0xff]
    %v56 = vld [vmem:[%s0 + $0x8] sm:$0xff]
    %v57 = vld [vmem:[#allocation3] sm:$0xff]
    %v58 = vld [vmem:[#allocation3 + $0x8] sm:$0xff]
    %v59 = vld [vmem:[#allocation3 + $0x10] sm:$0xff]
    %v60 = vld [vmem:[#allocation3 + $0x18] sm:$0xff]
    %v61 = vld [vmem:[#allocation3 + $0x20] sm:$0xff]
    %v62 = vld [vmem:[#allocation3 + $0x28] sm:$0xff]
    %v63 = vld [vmem:[#allocation3 + $0x30] sm:$0xff]
    %v64 = vld [vmem:[#allocation3 + $0x38] sm:$0xff]
    %v65 = vld [vmem:[#allocation3 + $0x40] sm:$0xff]
    %v66 = vld [vmem:[#allocation3 + $0x48] sm:$0xff]
    %v67 = vld [vmem:[#allocation3 + $0x50] sm:$0xff]
    %v68 = vld [vmem:[#allocation3 + $0x58] sm:$0xff]
    %v69 = vld [vmem:[#allocation3 + $0x60] sm:$0xff]
    %v70 = vld [vmem:[#allocation3 + $0x68] sm:$0xff]
    %v71 = vld [vmem:[#allocation3 + $0x70] sm:$0xff]
    %v72 = vld [vmem:[#allocation3 + $0x78] sm:$0xff]
    %v73 = vld [vmem:[%s2] sm:$0x1]
    %v75 = vlaneseq
    %v76 = vshrl.u32 %v75, 7
    %v77 = vsub.s32 0, %v76
    %v78 = vrot.slane %v73, %v77
    %80 = vmatprep.subr.mxu0 0.0
    %81 = vmatpush1.msra.mxu0 %v57
    %82 = vmatprep.subr.mxu0 0.0
    %83 = vmatpush1.msra.mxu0 %v58
    %84 = vmatprep.subr.mxu0 0.0
    %85 = vmatpush1.msra.mxu0 %v59
    %86 = vmatprep.subr.mxu0 0.0
    %87 = vmatpush1.msra.mxu0 %v60
    %88 = vmatprep.subr.mxu0 0.0
    %89 = vmatpush1.msra.mxu0 %v61
    %90 = vmatprep.subr.mxu0 0.0
    %91 = vmatpush1.msra.mxu0 %v62
    %92 = vmatprep.subr.mxu0 0.0
    %93 = vmatpush1.msra.mxu0 %v63
    %94 = vmatprep.subr.mxu0 0.0
    %95 = vmatpush1.msra.mxu0 %v64
    %96 = vmatprep.subr.mxu0 0.0
    %97 = vmatpush1.msra.mxu0 %v65
    %98 = vmatprep.subr.mxu0 0.0
    %99 = vmatpush1.msra.mxu0 %v66
    %100 = vmatprep.subr.mxu0 0.0
    %101 = vmatpush1.msra.mxu0 %v67
    %102 = vmatprep.subr.mxu0 0.0
    %103 = vmatpush1.msra.mxu0 %v68
    %104 = vmatprep.subr.mxu0 0.0
    %105 = vmatpush1.msra.mxu0 %v69
    %106 = vmatprep.subr.mxu0 0.0
    %107 = vmatpush1.msra.mxu0 %v70
    %108 = vmatprep.subr.mxu0 0.0
    %109 = vmatpush1.msra.mxu0 %v71
    %110 = vmatprep.subr.mxu0 0.0
    %111 = vmatpush1.msra.mxu0 %v72
    %112 = vmatprep.subr.mxu0 0.0
    %113 = vmatpush1.msra.mxu0 0.0
    %114 = vmatprep.subr.mxu0 0.0
    %115 = vmatpush1.msra.mxu0 0.0
    %116 = vmatprep.subr.mxu0 0.0
    %117 = vmatpush1.msra.mxu0 0.0
    %118 = vmatprep.subr.mxu0 0.0
    %119 = vmatpush1.msra.mxu0 0.0
    %120 = vmatprep.subr.mxu0 0.0
    %121 = vmatpush1.msra.mxu0 0.0
    %122 = vmatprep.subr.mxu0 0.0
    %123 = vmatpush1.msra.mxu0 0.0
    %124 = vmatprep.subr.mxu0 0.0
    %125 = vmatpush1.msra.mxu0 0.0
    %126 = vmatprep.subr.mxu0 0.0
    %127 = vmatpush1.msra.mxu0 0.0
    %128 = vmatprep.subr.mxu0 0.0
    %129 = vmatpush1.msra.mxu0 0.0
    %130 = vmatprep.subr.mxu0 0.0
    %131 = vmatpush1.msra.mxu0 0.0
    %132 = vmatprep.subr.mxu0 0.0
    %133 = vmatpush1.msra.mxu0 0.0
    %134 = vmatprep.subr.mxu0 0.0
    %135 = vmatpush1.msra.mxu0 0.0
    %136 = vmatprep.subr.mxu0 0.0
    %137 = vmatpush1.msra.mxu0 0.0
    %138 = vmatprep.subr.mxu0 0.0
    %139 = vmatpush1.msra.mxu0 0.0
    %140 = vmatprep.subr.mxu0 0.0
    %141 = vmatpush1.msra.mxu0 0.0
    %142 = vmatprep.subr.mxu0 0.0
    %143 = vmatpush1.msra.mxu0 0.0
    %144 = vmatprep.mubr.f32.mxu0 0.0
    %145 = vmatmul.mubr.f32.gmra.mrb[0].mxu0 %v55
    %v146 = vpop.f32.mrb[0].mxu0
    %v147 = vadd.f32 %v78, %v146
    %v148 = vpop.f32.mrb[0].mxu0
    %149 = vmatprep.mubr.f32.mxu0 0.0
    %150 = vmatmul.mubr.f32.gmra.mrb[0].mxu0 %v56
    %v151 = vpop.f32.mrb[0].mxu0
    %v152 = vadd.f32 %v78, %v151
    %v153 = vpop.f32.mrb[0].mxu0
    %154 = vdwg.mxu0
    %v155 = vmax.f32 %v147, 0.0
    %v156 = vmax.f32 %v152, 0.0
    %v157 = vld [vmem:[#allocation2] sm:$0xff]
    %v158 = vld [vmem:[#allocation2 + $0x8] sm:$0xff]
    %v159 = vld [vmem:[#allocation6] sm:$0xff]
    %v160 = vld [vmem:[#allocation6 + $0x8] sm:$0xff]
    %v161 = vld [vmem:[#allocation6 + $0x10] sm:$0xff]
    %v162 = vld [vmem:[#allocation6 + $0x18] sm:$0xff]
    %v163 = vld [vmem:[#allocation6 + $0x20] sm:$0xff]
    %v164 = vld [vmem:[#allocation6 + $0x28] sm:$0xff]
    %v165 = vld [vmem:[#allocation6 + $0x30] sm:$0xff]
    %v166 = vld [vmem:[#allocation6 + $0x38] sm:$0xff]
    %v167 = vld [vmem:[#allocation6 + $0x40] sm:$0xff]
    %v168 = vld [vmem:[#allocation6 + $0x48] sm:$0xff]
    %v169 = vld [vmem:[#allocation6 + $0x50] sm:$0xff]
    %v170 = vld [vmem:[#allocation6 + $0x58] sm:$0xff]
    %v171 = vld [vmem:[#allocation6 + $0x60] sm:$0xff]
    %v172 = vld [vmem:[#allocation6 + $0x68] sm:$0xff]
    %v173 = vld [vmem:[#allocation6 + $0x70] sm:$0xff]
    %v174 = vld [vmem:[#allocation6 + $0x78] sm:$0xff]
    %175 = vmatprep.subr.mxu0 0.0
    %176 = vmatpush1.msra.mxu0 %v159
    %177 = vmatprep.subr.mxu0 0.0
    %178 = vmatpush1.msra.mxu0 %v160
    %179 = vmatprep.subr.mxu0 0.0
    %180 = vmatpush1.msra.mxu0 %v161
    %181 = vmatprep.subr.mxu0 0.0
    %182 = vmatpush1.msra.mxu0 %v162
    %183 = vmatprep.subr.mxu0 0.0
    %184 = vmatpush1.msra.mxu0 %v163
    %185 = vmatprep.subr.mxu0 0.0
    %186 = vmatpush1.msra.mxu0 %v164
    %187 = vmatprep.subr.mxu0 0.0
    %188 = vmatpush1.msra.mxu0 %v165
    %189 = vmatprep.subr.mxu0 0.0
    %190 = vmatpush1.msra.mxu0 %v166
    %191 = vmatprep.subr.mxu0 0.0
    %192 = vmatpush1.msra.mxu0 %v167
    %193 = vmatprep.subr.mxu0 0.0
    %194 = vmatpush1.msra.mxu0 %v168
    %195 = vmatprep.subr.mxu0 0.0
    %196 = vmatpush1.msra.mxu0 %v169
    %197 = vmatprep.subr.mxu0 0.0
    %198 = vmatpush1.msra.mxu0 %v170
    %199 = vmatprep.subr.mxu0 0.0
    %200 = vmatpush1.msra.mxu0 %v171
    %201 = vmatprep.subr.mxu0 0.0
    %202 = vmatpush1.msra.mxu0 %v172
    %203 = vmatprep.subr.mxu0 0.0
    %204 = vmatpush1.msra.mxu0 %v173
    %205 = vmatprep.subr.mxu0 0.0
    %206 = vmatpush1.msra.mxu0 %v174
    %207 = vmatprep.subr.mxu0 0.0
    %208 = vmatpush1.msra.mxu0 0.0
    %209 = vmatprep.subr.mxu0 0.0
    %210 = vmatpush1.msra.mxu0 0.0
    %211 = vmatprep.subr.mxu0 0.0
    %212 = vmatpush1.msra.mxu0 0.0
    %213 = vmatprep.subr.mxu0 0.0
    %214 = vmatpush1.msra.mxu0 0.0
    %215 = vmatprep.subr.mxu0 0.0
    %216 = vmatpush1.msra.mxu0 0.0
    %217 = vmatprep.subr.mxu0 0.0
    %218 = vmatpush1.msra.mxu0 0.0
    %219 = vmatprep.subr.mxu0 0.0
    %220 = vmatpush1.msra.mxu0 0.0
    %221 = vmatprep.subr.mxu0 0.0
    %222 = vmatpush1.msra.mxu0 0.0
    %223 = vmatprep.subr.mxu0 0.0
    %224 = vmatpush1.msra.mxu0 0.0
    %225 = vmatprep.subr.mxu0 0.0
    %226 = vmatpush1.msra.mxu0 0.0
    %227 = vmatprep.subr.mxu0 0.0
    %228 = vmatpush1.msra.mxu0 0.0
    %229 = vmatprep.subr.mxu0 0.0
    %230 = vmatpush1.msra.mxu0 0.0
    %231 = vmatprep.subr.mxu0 0.0
    %232 = vmatpush1.msra.mxu0 0.0
    %233 = vmatprep.subr.mxu0 0.0
    %234 = vmatpush1.msra.mxu0 0.0
    %235 = vmatprep.subr.mxu0 0.0
    %236 = vmatpush1.msra.mxu0 0.0
    %237 = vmatprep.subr.mxu0 0.0
    %238 = vmatpush1.msra.mxu0 0.0
    %239 = vmatprep.mubr.f32.mxu0 0.0
    %240 = vmatmul.mubr.f32.gmra.mrb[0].mxu0 %v155
    %v241 = vpop.f32.mrb[0].mxu0
    %v242 = vadd.f32 0.0, %v241
    %v243 = vpop.f32.mrb[0].mxu0
    %244 = vmatprep.mubr.f32.mxu0 0.0
    %245 = vmatmul.mubr.f32.gmra.mrb[0].mxu0 %v156
    %v246 = vpop.f32.mrb[0].mxu0
    %v247 = vadd.f32 0.0, %v246
    %v248 = vpop.f32.mrb[0].mxu0
    %249 = vdwg.mxu0
    %v250 = vadd.f32 %v157, %v242
    %v251 = vadd.f32 %v158, %v247
    %252 = vst [vmem:[#allocation2] sm:$0xff] %v250
    %253 = vst [vmem:[#allocation2 + $0x8] sm:$0xff] %v251
    // Predicated region
    $region34: #{_ffn_padded.1} parent=1 // pred_check
      %p254 = pneg %p49
    $region35: #{_ffn_padded.1} parent=1 // pred_check_branch
      %256 = sbr.rel (%p254) target = $region37
    $region36: #{_ffn_padded.1} parent=1 // pred_region
      %v257 = vld [vmem:[#allocation2] sm:$0xff]
      %v258 = vld [vmem:[#allocation2 + $0x8] sm:$0xff]
      %v259 = vld [vmem:[%s4] sm:$0x1]
      %v261 = vlaneseq
      %v262 = vshrl.u32 %v261, 7
      %v263 = vsub.s32 0, %v262
      %v264 = vrot.slane %v259, %v263
      %v266 = vadd.f32 %v257, %v264
      %v267 = vadd.f32 %v258, %v264
      %268 = vst [vmem:[#allocation8] sm:$0xff] %v266
      %269 = vst [vmem:[#allocation8 + $0x8] sm:$0xff] %v267
    $region37: #{_ffn_padded.1} parent=1 // pred_fallthru
      _
    // Predicated region
    $region38: #{_ffn_padded.1} parent=1 // pred_check
      _
    $region39: #{_ffn_padded.1} parent=1 // pred_check_branch
      %271 = sbr.rel (0) target = $region41
    $region40: #{_ffn_padded.1} parent=1 // pred_region
      %s273 = ssub.s32 256, 256
      %274 = vsyncadd [#allocation5], %s273
      %s275 = sshll.u32 [#allocation8], 4
      %s276 = int_to_ptr.vmem [resolvable:$true] %s275
      %281 = dma.vmem_to_hbm [thread:$0]  %s276, 256, %s5, [#allocation5], 128, 128, 8
    $region41: #{_ffn_padded.1} parent=1 // pred_fallthru
      _
    // Predicated region
    $region42: #{_ffn_padded.1} parent=1 // pred_check
      _
    $region43: #{_ffn_padded.1} parent=1 // pred_check_branch
      %283 = sbr.rel (0) target = $region45
    $region44: #{_ffn_padded.1} parent=1 // pred_region
      %284 = dma.done [#allocation5], 256
    $region45: #{_ffn_padded.1} parent=1 // pred_fallthru
      _
    %285 = vsyncpa [#allocation4], 1
    %286 = vsyncpa [#allocation7], 1
    %287 = vsyncpa [#allocation5], 1

</llo_original>
